<compile_context>
chip_gen: v7x
topology: tpu7x:2x2x1
jax: 0.10.0
libtpu: 0.0.40
codegen_flags: <defaults>
</compile_context>

<pallas_src>
import functools

import jax
import jax.numpy as jnp
from jax import lax
from jax.experimental import pallas as pl
from jax.experimental.pallas import tpu as pltpu


def _bilinear_sigmoid_attention_kernel(
    length_ref,   # SMEM (B,) int32 — scalar-prefetched lengths
    ctx_ref,      # VMEM (S_ctx, D) f32 (batch dim squeezed, resident across q tiles)
    qry_ref,      # VMEM (TQ, D) f32
    out_ref,      # VMEM (TQ, 2*D) f32
    *rest,        # [scores_ref,] ctx_key_ref, ctx_mm_ref   (scratch last)
    normalize: bool,
    tq: int,
    matmul_dtype,
    fast_math: bool,
    with_scores: bool,
):
    if with_scores:
        scores_ref, ctx_key_ref, ctx_mm_ref = rest
    else:
        ctx_key_ref, ctx_mm_ref = rest
        scores_ref = None

    b = pl.program_id(0)
    qi = pl.program_id(1)
    l = length_ref[b]
    d = ctx_ref.shape[-1]

    # ---- once per batch element: normalize + cast the resident context -----
    # (hoisted out of the query-tile loop; qi axis is "arbitrary" so the
    # scratch persists across all query tiles of this batch element).
    @pl.when(qi == 0)
    def _init_ctx():
        ctx = ctx_ref[...]                                    # (S_ctx, D) f32
        ctx_mm_ref[...] = ctx.astype(matmul_dtype)
        if normalize:
            c_ss = jnp.sum(ctx * ctx, axis=-1, keepdims=True)
            inv = jnp.where(c_ss == 0.0, 1.0, lax.rsqrt(c_ss))
            ctx_key_ref[...] = (ctx * inv).astype(matmul_dtype)
        else:
            ctx_key_ref[...] = ctx.astype(matmul_dtype)

    # ---- per query tile -----------------------------------------------------
    qry = qry_ref[...]                                        # (TQ, D) f32
    if normalize:
        # L2 normalize along features: rsqrt (EUP) * mul; zero norms -> 1
        # (matches masked_fill_(norm.eq(0), 1) in the PyTorch module).
        q_ss = jnp.sum(qry * qry, axis=-1, keepdims=True)
        q = qry * jnp.where(q_ss == 0.0, 1.0, lax.rsqrt(q_ss))
    else:
        q = qry

    # First half of the concat output is the (normalized) query; the module
    # never masks it, so store it unconditionally (overlaps the matmuls).
    out_ref[:, :d] = q.astype(out_ref.dtype)

    @pl.when(qi * tq < l)
    def _compute():
        # raw_scores = q @ ctx_key^T, contracting the feature dims directly.
        raw = lax.dot_general(
            q.astype(matmul_dtype),
            ctx_key_ref[...],
            dimension_numbers=(((1,), (1,)), ((), ())),
            preferred_element_type=jnp.float32,
        )                                                     # (TQ, S_ctx) f32

        # sigmoid(x) == 0.5 * (tanh(x/2) + 1): one EUP op per element instead
        # of exp + divide. Column masking after the sigmoid (sigmoid(-inf)==0)
        # is equivalent to the -inf masked_fill and avoids inf arithmetic.
        scores = 0.5 * (jnp.tanh(0.5 * raw) + 1.0)
        col_ids = lax.broadcasted_iota(jnp.int32, raw.shape, 1)
        scores = jnp.where(col_ids >= l, 0.0, scores)

        # L1-normalize along the context dim; norms < 1 are clamped to 1.
        # Exact reciprocal on the (TQ, 1) column + broadcast mul (no full-width
        # divides); approx EUP reciprocal under fast_math.
        s_norm = jnp.maximum(jnp.sum(scores, axis=-1, keepdims=True), 1.0)
        if fast_math:
            inv_n = pl.reciprocal(s_norm, approx=True)
        else:
            inv_n = 1.0 / s_norm
        scores = scores * inv_n

        # Zero query rows >= length (row index is global: tile offset + local).
        row_ids = qi * tq + lax.broadcasted_iota(jnp.int32, scores.shape, 0)
        scores = jnp.where(row_ids >= l, 0.0, scores)

        # attended_context = scores @ context (the *unnormalized* context).
        attended = jnp.dot(
            scores.astype(matmul_dtype),
            ctx_mm_ref[...],
            preferred_element_type=jnp.float32,
        )                                                     # (TQ, D) f32

        out_ref[:, d:] = attended.astype(out_ref.dtype)
        if scores_ref is not None:
            scores_ref[...] = scores.astype(scores_ref.dtype)

    @pl.when(qi * tq >= l)
    def _skip():
        # Whole tile lies past `length`: scores and attended are all zeros.
        out_ref[:, d:] = jnp.zeros((tq, d), out_ref.dtype)
        if scores_ref is not None:
            scores_ref[...] = jnp.zeros(scores_ref.shape, scores_ref.dtype)


def _vmem_capacity_bytes():
    """Per-core VMEM capacity; conservative 64 MiB (v7x) fallback."""
    try:
        return int(pltpu.get_tpu_info().vmem_capacity_bytes)
    except Exception:
        return 64 * 1024 * 1024


def _choose_query_tile(s_q, s_ctx, d, *, budget_bytes, mm_itemsize, scores_itemsize):
    """Largest query tile whose VMEM working set fits `budget_bytes`.

    Accounts for: the double-buffered f32 context input block, the two
    matmul-dtype context caches (scratch), the double-buffered qry/out/scores
    pipeline blocks, and ~4 live (TQ, S_ctx) f32 intermediates inside the body
    (raw scores, sigmoid result, iota masks) that belong to no pipeline buffer.
    """
    fixed = 2 * 4 * s_ctx * d + 2 * mm_itemsize * s_ctx * d
    per_row = 2 * (4 * d + 4 * 2 * d + scores_itemsize * s_ctx)   # pipelined blocks
    per_row += 4 * 4 * s_ctx                                      # live intermediates
    avail = max(budget_bytes - fixed, 0)
    tq = max(8, avail // per_row) if per_row > 0 else s_q
    tq = int(min(tq, 1024))
    if tq >= s_q:
        return s_q                          # full dim is always a legal block
    # Round to the MXU M granule when VMEM allows (256 fills the 256x256 MXUs
    # of v6e/v7x, 128 matches v5e's 128-wide MXUs), else sublane alignment.
    for granule in (256, 128, 8):
        if tq >= granule:
            return (tq // granule) * granule
    return 8


def bilinear_sigmoid_attention(
    context,
    query,
    length,
    *,
    normalize=True,
    matmul_dtype=jnp.bfloat16,     # native-rate MXU, f32 accumulation (default)
    fast_math=False,               # approximate EUP reciprocal for the L1 renorm
    return_scores=True,            # set False to skip the (B,S_q,S_ctx) writeback
    scores_dtype=jnp.float32,      # e.g. jnp.bfloat16 to halve scores HBM traffic
    query_tile=None,               # override the auto-chosen query tile size
    vmem_limit_bytes=None,         # default: generation-aware (~112 MiB / 56 MiB)
):
    """context: (B, S_ctx, D) f32, query: (B, S_q, D) f32, length: (B,) int."""
    B, S_ctx, D = context.shape
    _, S_q, _ = query.shape
    length = length.astype(jnp.int32)

    cap = _vmem_capacity_bytes()
    if vmem_limit_bytes is None:
        vmem_limit_bytes = min(cap * 7 // 8, cap - (8 << 20))   # 112 MiB / 56 MiB
    budget = max(vmem_limit_bytes - (16 << 20), 8 << 20)

    mm_itemsize = jnp.dtype(matmul_dtype).itemsize
    sc_itemsize = jnp.dtype(scores_dtype).itemsize if return_scores else 0

    tq = query_tile if query_tile is not None else _choose_query_tile(
        S_q, S_ctx, D, budget_bytes=budget,
        mm_itemsize=mm_itemsize, scores_itemsize=sc_itemsize)
    n_q = pl.cdiv(S_q, tq)

    kernel = functools.partial(
        _bilinear_sigmoid_attention_kernel,
        normalize=normalize,
        tq=tq,
        matmul_dtype=matmul_dtype,
        fast_math=fast_math,
        with_scores=return_scores,
    )

    out_shape = [jax.ShapeDtypeStruct((B, S_q, 2 * D), jnp.float32)]
    out_specs = [pl.BlockSpec((pl.Squeezed(), tq, 2 * D),
                              lambda b, qi, ln: (b, qi, 0))]
    if return_scores:
        out_shape.append(jax.ShapeDtypeStruct((B, S_q, S_ctx), scores_dtype))
        out_specs.append(pl.BlockSpec((pl.Squeezed(), tq, S_ctx),
                                      lambda b, qi, ln: (b, qi, 0)))

    result = pl.pallas_call(
        kernel,
        out_shape=tuple(out_shape),
        grid_spec=pltpu.PrefetchScalarGridSpec(
            num_scalar_prefetch=1,
            grid=(B, n_q),
            in_specs=[
                # Context block index depends only on b, so it stays resident
                # in VMEM across consecutive query tiles of one batch element.
                pl.BlockSpec((pl.Squeezed(), S_ctx, D),
                             lambda b, qi, ln: (b, 0, 0)),
                pl.BlockSpec((pl.Squeezed(), tq, D),
                             lambda b, qi, ln: (b, qi, 0)),
            ],
            out_specs=out_specs,
            scratch_shapes=[
                pltpu.VMEM((S_ctx, D), matmul_dtype),   # normalized ctx keys
                pltpu.VMEM((S_ctx, D), matmul_dtype),   # raw ctx in matmul dtype
            ],
        ),
        compiler_params=pltpu.CompilerParams(
            # b is "parallel" (v7x shards batches across its 2 TCs); qi must be
            # "arbitrary" because the ctx scratch persists across query tiles.
            dimension_semantics=("parallel", "arbitrary"),
            vmem_limit_bytes=int(vmem_limit_bytes),
        ),
    )(length, context, query)

    if return_scores:
        return result
    return result[0]


def _reference(context, query, length, normalize=True):
    """Plain-JAX transcription of the PyTorch forward (sanity check)."""
    hp = jax.lax.Precision.HIGHEST
    if normalize:
        qn = jnp.linalg.norm(query, axis=2, keepdims=True)
        qn = jnp.where(qn == 0.0, 1.0, qn)
        q = query / qn
        cn = jnp.linalg.norm(context, axis=2, keepdims=True)
        cn = jnp.where(cn == 0.0, 1.0, cn)
        ck = context / cn
    else:
        q, ck = query, context
    raw = jnp.einsum("bqd,bkd->bqk", q, ck, precision=hp)
    col = jnp.arange(context.shape[1])[None, None, :]
    sc = jax.nn.sigmoid(raw)
    sc = jnp.where(col >= length[:, None, None], 0.0, sc)
    n = jnp.sum(sc, axis=2, keepdims=True)
    n = jnp.where(n < 1.0, 1.0, n)
    sc = sc / n
    row = jnp.arange(query.shape[1])[None, :, None]
    sc = jnp.where(row >= length[:, None, None], 0.0, sc)
    att = jnp.einsum("bqk,bkd->bqd", sc, context, precision=hp)
    return jnp.concatenate([q, att], axis=2), sc


if __name__ == "__main__":
    key = jax.random.PRNGKey(0)
    k1, k2, k3, k4 = jax.random.split(key, 4)

    # --- Test 1: single query tile, f32 matmuls (tight parity check) -------
    B, S, D = 2, 8, 32
    context = jax.random.normal(k1, (B, S, D), dtype=jnp.float32)
    query = jax.random.normal(k2, (B, S, D), dtype=jnp.float32)
    length = jnp.array([S, 5], dtype=jnp.int32)          # second batch padded

    ref_out, ref_scores = _reference(context, query, length)

    out, scores = bilinear_sigmoid_attention(
        context, query, length, matmul_dtype=jnp.float32)
    jax.block_until_ready((out, scores))
    assert jnp.allclose(out, ref_out, atol=5e-3, rtol=5e-3), "f32 output mismatch"
    assert jnp.allclose(scores, ref_scores, atol=5e-3, rtol=5e-3), "f32 scores mismatch"

    # --- Test 2: multi-tile query path (3 tiles of 8 rows), default bf16 ----
    # Exercises the per-batch ctx cache across query tiles, the partial-length
    # column/row masks, and the whole-tile skip branch (rows 16..23 of batch 1).
    B2, S_ctx2, S_q2, D2 = 2, 16, 24, 32
    ctx2 = jax.random.normal(k3, (B2, S_ctx2, D2), dtype=jnp.float32)
    qry2 = jax.random.normal(k4, (B2, S_q2, D2), dtype=jnp.float32)
    len2 = jnp.array([S_ctx2, 9], dtype=jnp.int32)
    out2, sc2 = bilinear_sigmoid_attention(ctx2, qry2, len2, query_tile=8)
    jax.block_until_ready((out2, sc2))
    ref_out2, ref_sc2 = _reference(ctx2, qry2, len2)
    assert jnp.allclose(out2, ref_out2, atol=1.5e-1, rtol=1.5e-1), "bf16 output mismatch"
    assert jnp.allclose(sc2, ref_sc2, atol=1.5e-1, rtol=1.5e-1), "bf16 scores mismatch"

    # --- Test 3: no-scores fast path (bf16 MXU + approx reciprocal) ---------
    out_f = bilinear_sigmoid_attention(
        context, query, length, fast_math=True, return_scores=False)
    jax.block_until_ready(out_f)
    assert out_f.shape == (B, S, 2 * D)
    assert jnp.allclose(out_f, ref_out, atol=1.5e-1, rtol=1.5e-1), "fast-path mismatch"

    print("KERNEL_OK")
</pallas_src>

<mosaic_0001>
module attributes {stable_mosaic.version = 11 : i64} {
  func.func @_bilinear_sigmoid_attention_kernel(%arg0: i32, %arg1: i32, %arg2: memref<2xi32, #tpu.memory_space<smem>>, %arg3: memref<1x8x32xf32, #tpu.memory_space<vmem>>, %arg4: memref<1x8x32xf32, #tpu.memory_space<vmem>>, %arg5: memref<1x8x64xf32, #tpu.memory_space<vmem>>, %arg6: memref<1x8x8xf32, #tpu.memory_space<vmem>>, %arg7: memref<8x32xf32, #tpu.memory_space<vmem>>, %arg8: memref<8x32xf32, #tpu.memory_space<vmem>>) attributes {dimension_semantics = [#tpu.dimension_semantics<parallel>, #tpu.dimension_semantics<arbitrary>], iteration_bounds = array<i64: 2, 1>, scalar_prefetch = 1 : i64, scratch_operands = 2 : i64, tpu.core_type = #tpu.core_type<tc>, window_params = [{transform_indices = @transform_0, window_bounds = array<i64: 1, 8, 32>}, {transform_indices = @transform_1, window_bounds = array<i64: 1, 8, 32>}, {transform_indices = @transform_2, window_bounds = array<i64: 1, 8, 64>}, {transform_indices = @transform_3, window_bounds = array<i64: 1, 8, 8>}]} {
    %0 = arith.index_cast %arg0 : i32 to index
    %1 = memref.load %arg2[%0] : memref<2xi32, #tpu.memory_space<smem>>
    %c0_i32 = arith.constant 0 : i32
    %2 = arith.cmpi eq, %arg1, %c0_i32 : i32
    %3 = arith.extui %2 : i1 to i32
    %c0_i32_0 = arith.constant 0 : i32
    %4 = arith.cmpi ne, %3, %c0_i32_0 : i32
    scf.if %4 {
      %c0_11 = arith.constant 0 : index
      %c0_12 = arith.constant 0 : index
      %c0_13 = arith.constant 0 : index
      %28 = vector.load %arg3[%c0_11, %c0_12, %c0_13] : memref<1x8x32xf32, #tpu.memory_space<vmem>>, vector<1x8x32xf32>
      %29 = vector.shape_cast %28 : vector<1x8x32xf32> to vector<8x32xf32>
      %c0_14 = arith.constant 0 : index
      %c0_15 = arith.constant 0 : index
      %30 = vector.load %arg8[%c0_14, %c0_15] : memref<8x32xf32, #tpu.memory_space<vmem>>, vector<8x32xf32>
      tpu.vector_store %arg8[%c0_14, %c0_15], %29 {strides = array<i32>} : memref<8x32xf32, #tpu.memory_space<vmem>>, vector<8x32xf32>,
      %31 = arith.mulf %29, %29 : vector<8x32xf32>
      %cst_16 = arith.constant dense<0.000000e+00> : vector<8xf32>
      %32 = vector.multi_reduction <add>, %31, %cst_16 [1] : vector<8x32xf32> to vector<8xf32>
      %33 = vector.shape_cast %32 : vector<8xf32> to vector<8x1xf32>
      %cst_17 = arith.constant 0.000000e+00 : f32
      %34 = vector.broadcast %cst_17 : f32 to vector<8x1xf32>
      %35 = arith.cmpf oeq, %33, %34 : vector<8x1xf32>
      %36 = math.rsqrt %33 : vector<8x1xf32>
      %cst_18 = arith.constant 1.000000e+00 : f32
      %37 = vector.broadcast %cst_18 : f32 to vector<8x1xf32>
      %38 = arith.select %35, %37, %36 : vector<8x1xi1>, vector<8x1xf32>
      %39 = vector.broadcast %38 : vector<8x1xf32> to vector<8x32xf32>
      %40 = arith.mulf %29, %39 : vector<8x32xf32>
      %c0_19 = arith.constant 0 : index
      %c0_20 = arith.constant 0 : index
      %41 = vector.load %arg7[%c0_19, %c0_20] : memref<8x32xf32, #tpu.memory_space<vmem>>, vector<8x32xf32>
      tpu.vector_store %arg7[%c0_19, %c0_20], %40 {strides = array<i32>} : memref<8x32xf32, #tpu.memory_space<vmem>>, vector<8x32xf32>,
    } else {
    }
    %c0 = arith.constant 0 : index
    %c0_1 = arith.constant 0 : index
    %c0_2 = arith.constant 0 : index
    %5 = vector.load %arg4[%c0, %c0_1, %c0_2] : memref<1x8x32xf32, #tpu.memory_space<vmem>>, vector<1x8x32xf32>
    %6 = vector.shape_cast %5 : vector<1x8x32xf32> to vector<8x32xf32>
    %7 = arith.mulf %6, %6 : vector<8x32xf32>
    %cst = arith.constant dense<0.000000e+00> : vector<8xf32>
    %8 = vector.multi_reduction <add>, %7, %cst [1] : vector<8x32xf32> to vector<8xf32>
    %9 = vector.shape_cast %8 : vector<8xf32> to vector<8x1xf32>
    %cst_3 = arith.constant 0.000000e+00 : f32
    %10 = vector.broadcast %cst_3 : f32 to vector<8x1xf32>
    %11 = arith.cmpf oeq, %9, %10 : vector<8x1xf32>
    %12 = math.rsqrt %9 : vector<8x1xf32>
    %cst_4 = arith.constant 1.000000e+00 : f32
    %13 = vector.broadcast %cst_4 : f32 to vector<8x1xf32>
    %14 = arith.select %11, %13, %12 : vector<8x1xi1>, vector<8x1xf32>
    %15 = vector.broadcast %14 : vector<8x1xf32> to vector<8x32xf32>
    %16 = arith.mulf %6, %15 : vector<8x32xf32>
    %c0_5 = arith.constant 0 : index
    %c0_6 = arith.constant 0 : index
    %c0_7 = arith.constant 0 : index
    %17 = vector.load %arg5[%c0_5, %c0_6, %c0_7] : memref<1x8x64xf32, #tpu.memory_space<vmem>>, vector<1x8x32xf32>
    %18 = vector.shape_cast %17 : vector<1x8x32xf32> to vector<8x32xf32>
    %19 = vector.shape_cast %16 : vector<8x32xf32> to vector<1x8x32xf32>
    tpu.vector_store %arg5[%c0_5, %c0_6, %c0_7], %19 {strides = array<i32>} : memref<1x8x64xf32, #tpu.memory_space<vmem>>, vector<1x8x32xf32>,
    %c8_i32 = arith.constant 8 : i32
    %20 = arith.muli %arg1, %c8_i32 : i32
    %21 = arith.cmpi slt, %20, %1 : i32
    %22 = arith.extui %21 : i1 to i32
    %c0_i32_8 = arith.constant 0 : i32
    %23 = arith.cmpi ne, %22, %c0_i32_8 : i32
    scf.if %23 {
      %c0_11 = arith.constant 0 : index
      %c0_12 = arith.constant 0 : index
      %28 = vector.load %arg7[%c0_11, %c0_12] : memref<8x32xf32, #tpu.memory_space<vmem>>, vector<8x32xf32>
      %cst_13 = arith.constant dense<0.000000e+00> : vector<8x8xf32>
      %29 = tpu.matmul %16, %28, %cst_13 {dimension_numbers = #tpu.dot_dimension_numbers<[1], [1], [0], [0], [0, 0, 1, 0], [], []>} : vector<8x32xf32>, vector<8x32xf32>, vector<8x8xf32> -> vector<8x8xf32>
      %cst_14 = arith.constant 5.000000e-01 : f32
      %30 = vector.broadcast %cst_14 : f32 to vector<8x8xf32>
      %31 = arith.mulf %30, %29 : vector<8x8xf32>
      %32 = math.tanh %31 : vector<8x8xf32>
      %cst_15 = arith.constant 1.000000e+00 : f32
      %33 = vector.broadcast %cst_15 : f32 to vector<8x8xf32>
      %34 = arith.addf %32, %33 : vector<8x8xf32>
      %cst_16 = arith.constant 5.000000e-01 : f32
      %35 = vector.broadcast %cst_16 : f32 to vector<8x8xf32>
      %36 = arith.mulf %35, %34 : vector<8x8xf32>
      %37 = tpu.iota {dimensions = array<i32: 1>} : vector<8x8xi32>
      %38 = vector.broadcast %1 : i32 to vector<8x8xi32>
      %39 = arith.cmpi sge, %37, %38 : vector<8x8xi32>
      %cst_17 = arith.constant 0.000000e+00 : f32
      %40 = vector.broadcast %cst_17 : f32 to vector<8x8xf32>
      %41 = arith.select %39, %40, %36 : vector<8x8xi1>, vector<8x8xf32>
      %cst_18 = arith.constant dense<0.000000e+00> : vector<8xf32>
      %42 = vector.multi_reduction <add>, %41, %cst_18 [1] : vector<8x8xf32> to vector<8xf32>
      %43 = vector.shape_cast %42 : vector<8xf32> to vector<8x1xf32>
      %cst_19 = arith.constant 1.000000e+00 : f32
      %44 = vector.broadcast %cst_19 : f32 to vector<8x1xf32>
      %45 = arith.maximumf %43, %44 : vector<8x1xf32>
      %cst_20 = arith.constant 1.000000e+00 : f32
      %46 = vector.broadcast %cst_20 : f32 to vector<8x1xf32>
      %47 = arith.divf %46, %45 : vector<8x1xf32>
      %48 = vector.broadcast %47 : vector<8x1xf32> to vector<8x8xf32>
      %49 = arith.mulf %41, %48 : vector<8x8xf32>
      %c8_i32_21 = arith.constant 8 : i32
      %50 = arith.muli %arg1, %c8_i32_21 : i32
      %51 = tpu.iota {dimensions = array<i32: 0>} : vector<8x8xi32>
      %52 = vector.broadcast %50 : i32 to vector<8x8xi32>
      %53 = arith.addi %52, %51 : vector<8x8xi32>
      %54 = vector.broadcast %1 : i32 to vector<8x8xi32>
      %55 = arith.cmpi sge, %53, %54 : vector<8x8xi32>
      %cst_22 = arith.constant 0.000000e+00 : f32
      %56 = vector.broadcast %cst_22 : f32 to vector<8x8xf32>
      %57 = arith.select %55, %56, %49 : vector<8x8xi1>, vector<8x8xf32>
      %c0_23 = arith.constant 0 : index
      %c0_24 = arith.constant 0 : index
      %58 = vector.load %arg8[%c0_23, %c0_24] : memref<8x32xf32, #tpu.memory_space<vmem>>, vector<8x32xf32>
      %cst_25 = arith.constant dense<0.000000e+00> : vector<8x32xf32>
      %59 = tpu.matmul %57, %58, %cst_25 {dimension_numbers = #tpu.dot_dimension_numbers<[1], [0], [0], [1], [0, 0, 1, 1], [], []>} : vector<8x8xf32>, vector<8x32xf32>, vector<8x32xf32> -> vector<8x32xf32>
      %c0_26 = arith.constant 0 : index
      %c0_27 = arith.constant 0 : index
      %c32 = arith.constant 32 : index
      %60 = vector.load %arg5[%c0_26, %c0_27, %c32] : memref<1x8x64xf32, #tpu.memory_space<vmem>>, vector<1x8x32xf32>
      %61 = vector.shape_cast %60 : vector<1x8x32xf32> to vector<8x32xf32>
      %62 = vector.shape_cast %59 : vector<8x32xf32> to vector<1x8x32xf32>
      tpu.vector_store %arg5[%c0_26, %c0_27, %c32], %62 {strides = array<i32>} : memref<1x8x64xf32, #tpu.memory_space<vmem>>, vector<1x8x32xf32>,
      %c0_28 = arith.constant 0 : index
      %c0_29 = arith.constant 0 : index
      %c0_30 = arith.constant 0 : index
      %63 = vector.load %arg6[%c0_28, %c0_29, %c0_30] : memref<1x8x8xf32, #tpu.memory_space<vmem>>, vector<1x8x8xf32>
      %64 = vector.shape_cast %63 : vector<1x8x8xf32> to vector<8x8xf32>
      %65 = vector.shape_cast %57 : vector<8x8xf32> to vector<1x8x8xf32>
      tpu.vector_store %arg6[%c0_28, %c0_29, %c0_30], %65 {strides = array<i32>} : memref<1x8x8xf32, #tpu.memory_space<vmem>>, vector<1x8x8xf32>,
    } else {
    }
    %c8_i32_9 = arith.constant 8 : i32
    %24 = arith.muli %arg1, %c8_i32_9 : i32
    %25 = arith.cmpi sge, %24, %1 : i32
    %26 = arith.extui %25 : i1 to i32
    %c0_i32_10 = arith.constant 0 : i32
    %27 = arith.cmpi ne, %26, %c0_i32_10 : i32
    scf.if %27 {
      %cst_11 = arith.constant 0.000000e+00 : f32
      %28 = vector.broadcast %cst_11 : f32 to vector<8x32xf32>
      %c0_12 = arith.constant 0 : index
      %c0_13 = arith.constant 0 : index
      %c32 = arith.constant 32 : index
      %29 = vector.load %arg5[%c0_12, %c0_13, %c32] : memref<1x8x64xf32, #tpu.memory_space<vmem>>, vector<1x8x32xf32>
      %30 = vector.shape_cast %29 : vector<1x8x32xf32> to vector<8x32xf32>
      %31 = vector.shape_cast %28 : vector<8x32xf32> to vector<1x8x32xf32>
      tpu.vector_store %arg5[%c0_12, %c0_13, %c32], %31 {strides = array<i32>} : memref<1x8x64xf32, #tpu.memory_space<vmem>>, vector<1x8x32xf32>,
      %cst_14 = arith.constant 0.000000e+00 : f32
      %32 = vector.broadcast %cst_14 : f32 to vector<8x8xf32>
      %c0_15 = arith.constant 0 : index
      %c0_16 = arith.constant 0 : index
      %c0_17 = arith.constant 0 : index
      %33 = vector.load %arg6[%c0_15, %c0_16, %c0_17] : memref<1x8x8xf32, #tpu.memory_space<vmem>>, vector<1x8x8xf32>
      %34 = vector.shape_cast %33 : vector<1x8x8xf32> to vector<8x8xf32>
      %35 = vector.shape_cast %32 : vector<8x8xf32> to vector<1x8x8xf32>
      tpu.vector_store %arg6[%c0_15, %c0_16, %c0_17], %35 {strides = array<i32>} : memref<1x8x8xf32, #tpu.memory_space<vmem>>, vector<1x8x8xf32>,
    } else {
    }
    return
  }
  func.func @transform_0(%arg0: i32, %arg1: i32, %arg2: memref<2xi32, #tpu.memory_space<smem>>) -> (i32, i32, i32) {
    %c0_i32 = arith.constant 0 : i32
    %c0_i32_0 = arith.constant 0 : i32
    %c0_i32_1 = arith.constant 0 : i32
    return %arg0, %c0_i32, %c0_i32_0 : i32, i32, i32
  }
  func.func @transform_1(%arg0: i32, %arg1: i32, %arg2: memref<2xi32, #tpu.memory_space<smem>>) -> (i32, i32, i32) {
    %c0_i32 = arith.constant 0 : i32
    %c0_i32_0 = arith.constant 0 : i32
    return %arg0, %arg1, %c0_i32 : i32, i32, i32
  }
  func.func @transform_2(%arg0: i32, %arg1: i32, %arg2: memref<2xi32, #tpu.memory_space<smem>>) -> (i32, i32, i32) {
    %c0_i32 = arith.constant 0 : i32
    %c0_i32_0 = arith.constant 0 : i32
    return %arg0, %arg1, %c0_i32 : i32, i32, i32
  }
  func.func @transform_3(%arg0: i32, %arg1: i32, %arg2: memref<2xi32, #tpu.memory_space<smem>>) -> (i32, i32, i32) {
    %c0_i32 = arith.constant 0 : i32
    %c0_i32_0 = arith.constant 0 : i32
    return %arg0, %arg1, %c0_i32 : i32, i32, i32
  }
}

</mosaic_0001>

<llo_original>
// kernel: tpu_custom_call.1
$region0: #{tpu_custom_call.1}
  #allocation0 [shape = 'u32[]', space=smem, size = 0x4, offset = 0x4, fixed_abs, tag = 'smem constant byte address 0x4 - core index']
  #allocation1 [shape = 'u32[144,128]{1,0:T(1,128)}', space=vmem, size = 0x12000, scoped, tag = 'internal scratch']
  #allocation2 [shape = 'f32[8,32]{1,0:T(8,128)}', space=vmem, size = 0x1000, scoped, tag = 'scratch operand']
  #allocation3 [shape = 'f32[8,32]{1,0:T(8,128)}', space=vmem, size = 0x1000, scoped, tag = 'scratch operand']
  #allocation4 [shape = 's32[1]{0}', space=sflag, size = 0x4, scoped, tag = 'scoped memory for tpu_custom_call.1']
  #allocation5 [shape = 'u8[512]{0}', space=smem, size = 0x200, scoped, tag = 'prefetched SMEM operand 0']
  %s0 = inlined_call_operand.hbm [shape: s32[2], index: 0, kind: input, shape index: {}]
  %s1 = inlined_call_operand.hbm [shape: f32[2,8,32], index: 1, kind: input, shape index: {}]
  %s2 = inlined_call_operand.hbm [shape: f32[2,8,32], index: 2, kind: input, shape index: {}]
  %s3 = inlined_call_operand.hbm [shape: f32[2,8,64], index: 3, kind: output, shape index: {0}]
  %s4 = inlined_call_operand.hbm [shape: f32[2,8,8], index: 4, kind: output, shape index: {1}]
  %5 = xla_tuple %s3, %s4
  %s6 = sld [smem:[#allocation0]]
  $region69: #{tpu_custom_call.1} parent=0
    _
  %s8 = ssub.s32 1, %s6
  %s9 = scalar_select 0, %s8, %s6
  %11 = dma.hbm_to_smem %s0, 16, [#allocation5], [#allocation4]
  %12 = dma.done [#allocation4], 16
  %13 = sfence
  $region1: #{tpu_custom_call.1} parent=0
    #allocation6 [shape = 'u8[8192]{0}', space=vmem, size = 0x2000, scoped, tag = 'input window, operand 1']
    #allocation7 [shape = 's32[2]{0}', space=sflag, size = 0x8, scoped, tag = 'scoped memory for tpu_custom_call.1']
    #allocation8 [shape = 's32[2]{0}', space=sflag, size = 0x8, scoped, tag = 'scoped memory for tpu_custom_call.1']
    #allocation9 [shape = 'u8[8192]{0}', space=vmem, size = 0x2000, scoped, tag = 'input window, operand 2']
    #allocation10 [shape = 's32[2]{0}', space=sflag, size = 0x8, scoped, tag = 'scoped memory for tpu_custom_call.1']
    #allocation11 [shape = 'u8[8192]{0}', space=vmem, size = 0x2000, scoped, tag = 'output window, operand 0']
    #allocation12 [shape = 'u8[8192]{0}', space=vmem, size = 0x2000, scoped, tag = 'output window, operand 1']
    #allocation13 [shape = 's32[2]{0}', space=sflag, size = 0x8, scoped, tag = 'scoped memory for tpu_custom_call.1']
    %14 = vsyncpa [#allocation7], 0
    %s15 = scalar_lea.sflag [#allocation7], 1
    %16 = vsyncpa %s15, 0
    %17 = vsyncpa [#allocation10], 0
    %s18 = scalar_lea.sflag [#allocation10], 1
    %19 = vsyncpa %s18, 0
    %20 = vsyncpa [#allocation8], 0
    %s21 = scalar_lea.sflag [#allocation8], 1
    %22 = vsyncpa %s21, 0
    %23 = vsyncpa [#allocation13], 0
    %s24 = scalar_lea.sflag [#allocation13], 1
    %25 = vsyncpa %s24, 0
    loop: start=0, step=1, limit=4
    $region2: #{tpu_custom_call.1} parent=1 // loop_pre_header
      _
    $region3: #{tpu_custom_call.1} parent=1 // loop_header
      %s27 = sphi 0, %s31
      %p28 = scmp.ge.s32.totalorder %s27, 4
      %s34 = sphi 0, %s46
      %s35 = sphi 0, %s42
      %s36 = sphi 0, %s34
      %s37 = sphi 0, %s35
      %s38 = sphi 0, %s36
      %s39 = sphi 0, %s37
      %s49 = sphi 0, %s51
      %s52 = sphi 0, %s49
      %s53 = sphi 0, %s52
      %s69 = sphi 0, %s53
      %s77 = sphi 0, %s79
      %s80 = sphi 0, %s77
      %s81 = sphi 0, %s80
      %s97 = sphi 0, %s81
      %s105 = sphi 0, %s107
      %s108 = sphi 0, %s105
      %s109 = sphi 0, %s108
      %s125 = sphi 0, %s109
      %s133 = sphi 0, %s135
      %s136 = sphi 0, %s133
      %s137 = sphi 0, %s136
      %s153 = sphi 0, %s137
    $region4: #{tpu_custom_call.1} parent=1 // loop_header_branch
      %30 = sbr.rel (%p28) target = $region8
    $region5: #{tpu_custom_call.1} parent=1 // loop_body
      %s32 = ssub.s32 %s27, 1
      %s33 = ssub.s32 %s27, 2
      %s40 = sadd.s32 1, %s35
      %p41 = scmp.ge.s32.totalorder %s40, 1
      %s42 = scalar_select %p41, 0, %s40
      %s43 = sadd.s32 1, %s34
      %s44 = scalar_select %p41, %s43, %s34
      %p45 = scmp.ge.s32.totalorder %s44, 2
      %s46 = scalar_select %p45, 0, %s44
      %s47 = ssub.s32 %s34, %s46
      %p48 = scmp.eq.s32.totalorder %s47, 0
      %s50 = sadd.s32 %s49, 1
      %s51 = scalar_select %p48, %s49, %s50
      %p54 = pneg %p48
      %p55 = scmp.eq.s32.totalorder %s27, 1
      %p56 = por %p54, %p55
      %p57 = scmp.ne.s32.totalorder %s49, %s52
      %p58 = scmp.eq.s32.totalorder %s27, 0
      %p59 = por %p57, %p58
      %p60 = scmp.ne.s32.totalorder %s49, %s52
      %p61 = scmp.eq.s32.totalorder %s32, 1
      %p62 = por %p60, %p61
      %p63 = scmp.ne.s32.totalorder %s52, %s53
      %p64 = scmp.eq.s32.totalorder %s32, 0
      %p65 = por %p63, %p64
      %p66 = scmp.ne.s32.totalorder %s52, %s53
      %p67 = scmp.eq.s32.totalorder %s33, 1
      %p68 = por %p66, %p67
      %p70 = scmp.ne.s32.totalorder %s53, %s69
      %p71 = scmp.eq.s32.totalorder %s33, 0
      %p72 = por %p70, %p71
      %s73 = ssub.s32 %s34, %s46
      %s74 = ssub.s32 %s35, %s42
      %s75 = sor.u32 %s73, %s74
      %p76 = scmp.eq.s32.totalorder %s75, 0
      %s78 = sadd.s32 %s77, 1
      %s79 = scalar_select %p76, %s77, %s78
      %p82 = pneg %p76
      %p83 = scmp.eq.s32.totalorder %s27, 1
      %p84 = por %p82, %p83
      %p85 = scmp.ne.s32.totalorder %s77, %s80
      %p86 = scmp.eq.s32.totalorder %s27, 0
      %p87 = por %p85, %p86
      %p88 = scmp.ne.s32.totalorder %s77, %s80
      %p89 = scmp.eq.s32.totalorder %s32, 1
      %p90 = por %p88, %p89
      %p91 = scmp.ne.s32.totalorder %s80, %s81
      %p92 = scmp.eq.s32.totalorder %s32, 0
      %p93 = por %p91, %p92
      %p94 = scmp.ne.s32.totalorder %s80, %s81
      %p95 = scmp.eq.s32.totalorder %s33, 1
      %p96 = por %p94, %p95
      %p98 = scmp.ne.s32.totalorder %s81, %s97
      %p99 = scmp.eq.s32.totalorder %s33, 0
      %p100 = por %p98, %p99
      %s101 = ssub.s32 %s34, %s46
      %s102 = ssub.s32 %s35, %s42
      %s103 = sor.u32 %s101, %s102
      %p104 = scmp.eq.s32.totalorder %s103, 0
      %s106 = sadd.s32 %s105, 1
      %s107 = scalar_select %p104, %s105, %s106
      %p110 = pneg %p104
      %p111 = scmp.eq.s32.totalorder %s27, 1
      %p112 = por %p110, %p111
      %p113 = scmp.ne.s32.totalorder %s105, %s108
      %p114 = scmp.eq.s32.totalorder %s27, 0
      %p115 = por %p113, %p114
      %p116 = scmp.ne.s32.totalorder %s105, %s108
      %p117 = scmp.eq.s32.totalorder %s32, 1
      %p118 = por %p116, %p117
      %p119 = scmp.ne.s32.totalorder %s108, %s109
      %p120 = scmp.eq.s32.totalorder %s32, 0
      %p121 = por %p119, %p120
      %p122 = scmp.ne.s32.totalorder %s108, %s109
      %p123 = scmp.eq.s32.totalorder %s33, 1
      %p124 = por %p122, %p123
      %p126 = scmp.ne.s32.totalorder %s109, %s125
      %p127 = scmp.eq.s32.totalorder %s33, 0
      %p128 = por %p126, %p127
      %s129 = ssub.s32 %s34, %s46
      %s130 = ssub.s32 %s35, %s42
      %s131 = sor.u32 %s129, %s130
      %p132 = scmp.eq.s32.totalorder %s131, 0
      %s134 = sadd.s32 %s133, 1
      %s135 = scalar_select %p132, %s133, %s134
      %p138 = pneg %p132
      %p139 = scmp.eq.s32.totalorder %s27, 1
      %p140 = por %p138, %p139
      %p141 = scmp.ne.s32.totalorder %s133, %s136
      %p142 = scmp.eq.s32.totalorder %s27, 0
      %p143 = por %p141, %p142
      %p144 = scmp.ne.s32.totalorder %s133, %s136
      %p145 = scmp.eq.s32.totalorder %s32, 1
      %p146 = por %p144, %p145
      %p147 = scmp.ne.s32.totalorder %s136, %s137
      %p148 = scmp.eq.s32.totalorder %s32, 0
      %p149 = por %p147, %p148
      %p150 = scmp.ne.s32.totalorder %s136, %s137
      %p151 = scmp.eq.s32.totalorder %s33, 1
      %p152 = por %p150, %p151
      %p154 = scmp.ne.s32.totalorder %s137, %s153
      %p155 = scmp.eq.s32.totalorder %s33, 0
      %p156 = por %p154, %p155
      %p157 = scmp.le.s32.totalorder 1, %s27
      %p158 = scmp.lt.s32.totalorder %s27, 3
      %p159 = pnand %p157, %p158
      %p160 = pneg %p159
      // Predicated region
      $region9: #{tpu_custom_call.1} parent=5 // pred_check
        _
      $region10: #{tpu_custom_call.1} parent=5 // pred_check_branch
        %162 = sbr.rel (%p159) target = $region12
      $region11: #{tpu_custom_call.1} parent=5 // pred_region
        %s163 = ssub.s32 %s27, 1
      $region12: #{tpu_custom_call.1} parent=5 // pred_fallthru
        _
      %p164 = scmp.lt.s32.totalorder %s27, 2
      // Predicated region
      $region13: #{tpu_custom_call.1} parent=5 // pred_check
        %p165 = pneg %p164
      $region14: #{tpu_custom_call.1} parent=5 // pred_check_branch
        %167 = sbr.rel (%p165) target = $region16
      $region15: #{tpu_custom_call.1} parent=5 // pred_region
        // Predicated region
        $region17: #{tpu_custom_call.1} parent=15 // pred_check
          %p168 = pneg %p59
        $region18: #{tpu_custom_call.1} parent=15 // pred_check_branch
          %170 = sbr.rel (%p168) target = $region20
        $region19: #{tpu_custom_call.1} parent=15 // pred_region
          %s171 = sand.u32 %s49, 1
          %s172 = scalar_lea.sflag [#allocation7], %s171
          %s173 = sand.u32 %s49, 1
          %s174 = smul.addr %s173, 8
          %s175 = scalar_lea.vmem [#allocation6], %s174
          %s177 = ssub.s32 128, 128
          %178 = vsyncadd %s172, %s177
          %s179 = smul.addr %s34, 128
          %s180 = scalar_lea.hbm %s1, %s179
          %s182 = sshll.u32 %s175, 4
          %s183 = int_to_ptr.vmem [resolvable:$true] %s182
          %185 = dma.hbm_to_vmem [thread:$0]  %s180, 128, %s183, %s172
        $region20: #{tpu_custom_call.1} parent=15 // pred_fallthru
          _
        // Predicated region
        $region21: #{tpu_custom_call.1} parent=15 // pred_check
          %p186 = pneg %p87
        $region22: #{tpu_custom_call.1} parent=15 // pred_check_branch
          %188 = sbr.rel (%p186) target = $region24
        $region23: #{tpu_custom_call.1} parent=15 // pred_region
          %s189 = sand.u32 %s77, 1
          %s190 = scalar_lea.sflag [#allocation10], %s189
          %s191 = sand.u32 %s77, 1
          %s192 = smul.addr %s191, 8
          %s193 = scalar_lea.vmem [#allocation9], %s192
          %s195 = ssub.s32 128, 128
          %196 = vsyncadd %s190, %s195
          %s197 = sadd.s32 %s35, %s34
          %s198 = smul.addr %s197, 128
          %s199 = scalar_lea.hbm %s2, %s198
          %s201 = sshll.u32 %s193, 4
          %s202 = int_to_ptr.vmem [resolvable:$true] %s201
          %204 = dma.hbm_to_vmem [thread:$0]  %s199, 128, %s202, %s190
        $region24: #{tpu_custom_call.1} parent=15 // pred_fallthru
          _
      $region16: #{tpu_custom_call.1} parent=5 // pred_fallthru
        _
      %p205 = scmp.le.s32.totalorder 1, %s27
      %p206 = scmp.lt.s32.totalorder %s27, 3
      %p207 = pnand %p205, %p206
      %p208 = pneg %p207
      // Predicated region
      $region25: #{tpu_custom_call.1} parent=5 // pred_check
        _
      $region26: #{tpu_custom_call.1} parent=5 // pred_check_branch
        %210 = sbr.rel (%p207) target = $region28
      $region27: #{tpu_custom_call.1} parent=5 // pred_region
        %s211 = ssub.s32 %s27, 1
        %s212 = sand.u32 %s52, 1
        %s213 = scalar_lea.sflag [#allocation7], %s212
        %s214 = sand.u32 %s52, 1
        %s215 = smul.addr %s214, 8
        %s216 = scalar_lea.vmem [#allocation6], %s215
        // Predicated region
        $region29: #{tpu_custom_call.1} parent=27 // pred_check
          %p217 = pneg %p65
        $region30: #{tpu_custom_call.1} parent=27 // pred_check_branch
          %219 = sbr.rel (%p217) target = $region32
        $region31: #{tpu_custom_call.1} parent=27 // pred_region
          %220 = dma.done %s213, 128
        $region32: #{tpu_custom_call.1} parent=27 // pred_fallthru
          _
        %s221 = sand.u32 %s80, 1
        %s222 = scalar_lea.sflag [#allocation10], %s221
        %s223 = sand.u32 %s80, 1
        %s224 = smul.addr %s223, 8
        %s225 = scalar_lea.vmem [#allocation9], %s224
        // Predicated region
        $region33: #{tpu_custom_call.1} parent=27 // pred_check
          %p226 = pneg %p93
        $region34: #{tpu_custom_call.1} parent=27 // pred_check_branch
          %228 = sbr.rel (%p226) target = $region36
        $region35: #{tpu_custom_call.1} parent=27 // pred_region
          %229 = dma.done %s222, 128
        $region36: #{tpu_custom_call.1} parent=27 // pred_fallthru
          _
        %s230 = sand.u32 %s52, 1
        %s231 = scalar_lea.sflag [#allocation7], %s230
        %s232 = sand.u32 %s52, 1
        %s233 = smul.addr %s232, 8
        %s234 = scalar_lea.vmem [#allocation6], %s233
        %p235 = pneg %p65
        %p236 = pneg %p62
        %s237 = sand.u32 %s80, 1
        %s238 = scalar_lea.sflag [#allocation10], %s237
        %s239 = sand.u32 %s80, 1
        %s240 = smul.addr %s239, 8
        %s241 = scalar_lea.vmem [#allocation9], %s240
        %p242 = pneg %p93
        %p243 = pneg %p90
        %p244 = pneg %p121
        %p245 = pneg %p118
        %s246 = sand.u32 %s108, 1
        %s247 = scalar_lea.sflag [#allocation8], %s246
        %s248 = sand.u32 %s108, 1
        %s249 = smul.addr %s248, 8
        %s250 = scalar_lea.vmem [#allocation11], %s249
        %p251 = pneg %p149
        %p252 = pneg %p146
        %s253 = sand.u32 %s136, 1
        %s254 = scalar_lea.sflag [#allocation13], %s253
        %s255 = sand.u32 %s136, 1
        %s256 = smul.addr %s255, 8
        %s257 = scalar_lea.vmem [#allocation12], %s256
        %s258 = sld [smem:[#allocation5 + %s36]]
        %p259 = scmp.eq.s32.totalorder %s37, 0
        // Predicated region
        $region37: #{tpu_custom_call.1} parent=27 // pred_check
          %p260 = pneg %p259
        $region38: #{tpu_custom_call.1} parent=27 // pred_check_branch
          %262 = sbr.rel (%p260) target = $region40
        $region39: #{tpu_custom_call.1} parent=27 // pred_region
          %v263 = vld [vmem:[%s216] sm:$0xff]
          %vm264 = vcmask 261120
          %265 = vst.msk [vmem:[#allocation3] sm:$0xff] %vm264, %v263
          %v266 = vmul.f32 %v263, %v263
          %v267 = vsel %vm264, %v266, 0.0
          %268 = vadd.xlane.f32.xlu0 %v267
          %v269 = vpop.xlane.xlu0 %268
          %vm270 = vcmp.eq.f32.partialorder %v269, 0.0
          %v271 = vrsqrt.pop %v269
          %v272 = vsel %vm270, 1.0, %v271
          %v273 = vmul.f32 %v263, %v272
          %274 = vst.msk [vmem:[#allocation2] sm:$0xff] %vm264, %v273
        $region40: #{tpu_custom_call.1} parent=27 // pred_fallthru
          _
        %v275 = vld [vmem:[%s225] sm:$0xff]
        %v276 = vmul.f32 %v275, %v275
        %vm277 = vcmask 261120
        %v278 = vsel %vm277, %v276, 0.0
        %279 = vadd.xlane.f32.xlu0 %v278
        %v280 = vpop.xlane.xlu0 %279
        %vm281 = vcmp.eq.f32.partialorder %v280, 0.0
        %v282 = vrsqrt.pop %v280
        %v283 = vsel %vm281, 1.0, %v282
        %v284 = vmul.f32 %v275, %v283
        %285 = vst.msk [vmem:[%s250] sm:$0xff] %vm277, %v284
        %s286 = smul.u32 %s37, 8
        %p287 = scmp.lt.s32.totalorder %s286, %s258
        // Predicated region
        $region41: #{tpu_custom_call.1} parent=27 // pred_check
          %p288 = pneg %p287
        $region42: #{tpu_custom_call.1} parent=27 // pred_check_branch
          %290 = sbr.rel (%p288) target = $region44
        $region43: #{tpu_custom_call.1} parent=27 // pred_region
          %v291 = vld [vmem:[#allocation2] sm:$0xff]
          %v293 = vsel %vm277, %v284, 0
          %v296 = vsel %vm277, %v291, 0
          %298 = vmatprep.subr.mxu0 0.0
          %299 = vmatpush1.xpose.msra.mxu0 %v296
          %300 = vmatprep.subr.mxu0 0.0
          %301 = vmatpush1.xpose.msra.mxu0 0.0
          %302 = vmatprep.subr.mxu0 0.0
          %303 = vmatpush1.xpose.msra.mxu0 0.0
          %304 = vmatprep.subr.mxu0 0.0
          %305 = vmatpush1.xpose.msra.mxu0 0.0
          %306 = vmatprep.subr.mxu0 0.0
          %307 = vmatpush1.xpose.msra.mxu0 0.0
          %308 = vmatprep.subr.mxu0 0.0
          %309 = vmatpush1.xpose.msra.mxu0 0.0
          %310 = vmatprep.subr.mxu0 0.0
          %311 = vmatpush1.xpose.msra.mxu0 0.0
          %312 = vmatprep.subr.mxu0 0.0
          %313 = vmatpush1.xpose.msra.mxu0 0.0
          %314 = vmatprep.subr.mxu0 0.0
          %315 = vmatpush1.xpose.msra.mxu0 0.0
          %316 = vmatprep.subr.mxu0 0.0
          %317 = vmatpush1.xpose.msra.mxu0 0.0
          %318 = vmatprep.subr.mxu0 0.0
          %319 = vmatpush1.xpose.msra.mxu0 0.0
          %320 = vmatprep.subr.mxu0 0.0
          %321 = vmatpush1.xpose.msra.mxu0 0.0
          %322 = vmatprep.subr.mxu0 0.0
          %323 = vmatpush1.xpose.msra.mxu0 0.0
          %324 = vmatprep.subr.mxu0 0.0
          %325 = vmatpush1.xpose.msra.mxu0 0.0
          %326 = vmatprep.subr.mxu0 0.0
          %327 = vmatpush1.xpose.msra.mxu0 0.0
          %328 = vmatprep.subr.mxu0 0.0
          %329 = vmatpush1.xpose.msra.mxu0 0.0
          %330 = vmatprep.subr.mxu0 0.0
          %331 = vmatpush1.xpose.msra.mxu0 0.0
          %332 = vmatprep.subr.mxu0 0.0
          %333 = vmatpush1.xpose.msra.mxu0 0.0
          %334 = vmatprep.subr.mxu0 0.0
          %335 = vmatpush1.xpose.msra.mxu0 0.0
          %336 = vmatprep.subr.mxu0 0.0
          %337 = vmatpush1.xpose.msra.mxu0 0.0
          %338 = vmatprep.subr.mxu0 0.0
          %339 = vmatpush1.xpose.msra.mxu0 0.0
          %340 = vmatprep.subr.mxu0 0.0
          %341 = vmatpush1.xpose.msra.mxu0 0.0
          %342 = vmatprep.subr.mxu0 0.0
          %343 = vmatpush1.xpose.msra.mxu0 0.0
          %344 = vmatprep.subr.mxu0 0.0
          %345 = vmatpush1.xpose.msra.mxu0 0.0
          %346 = vmatprep.subr.mxu0 0.0
          %347 = vmatpush1.xpose.msra.mxu0 0.0
          %348 = vmatprep.subr.mxu0 0.0
          %349 = vmatpush1.xpose.msra.mxu0 0.0
          %350 = vmatprep.subr.mxu0 0.0
          %351 = vmatpush1.xpose.msra.mxu0 0.0
          %352 = vmatprep.subr.mxu0 0.0
          %353 = vmatpush1.xpose.msra.mxu0 0.0
          %354 = vmatprep.subr.mxu0 0.0
          %355 = vmatpush1.xpose.msra.mxu0 0.0
          %356 = vmatprep.subr.mxu0 0.0
          %357 = vmatpush1.xpose.msra.mxu0 0.0
          %358 = vmatprep.subr.mxu0 0.0
          %359 = vmatpush1.xpose.msra.mxu0 0.0
          %360 = vmatprep.subr.mxu0 0.0
          %361 = vmatpush1.xpose.msra.mxu0 0.0
          %362 = vmatprep.mubr.f32.mxu0 0.0
          %363 = vmatmul.mubr.f32.gmra.mrb[0].mxu0 %v293
          %v364 = vpop.f32.mrb[0].mxu0
          %v365 = vadd.f32 0.0, %v364
          %v366 = vpop.f32.mrb[0].mxu0
          %367 = vdwg.mxu0
          %v368 = vmul.f32 %v365, 0.5
          %v369 = vtanh.pop %v368
          %v370 = vadd.f32 %v369, 1.0
          %v371 = vmul.f32 %v370, 0.5
          %v372 = vlaneseq
          %v373 = vand.u32 %v372, 127
          %v374 = vstv %s258
          %vm375 = vcmp.ge.s32.totalorder %v373, %v374
          %v376 = vsel %vm375, 0.0, %v371
          %vm377 = vcmask 64512
          %v378 = vsel %vm377, %v376, 0.0
          %379 = vadd.xlane.f32.xlu0 %v378
          %v380 = vpop.xlane.xlu0 %379
          %v381 = vmax.f32 %v380, 1.0
          %v382 = vrcp.pop %v381
          %v383 = vmul.f32 1.0, %v382
          %v384 = vmul.f32 %v376, %v383
          %v385 = vlaneseq
          %v386 = vshrl.u32 %v385, 7
          %v387 = vstv %s286
          %v388 = vadd.s32 %v387, %v386
          %vm389 = vcmp.ge.s32.totalorder %v388, %v374
          %v390 = vsel %vm389, 0.0, %v384
          %v391 = vld [vmem:[#allocation3] sm:$0xff]
          %v393 = vsel %vm377, %v390, 0
          %395 = vmatprep.subr.mxu0 0.0
          %396 = vmatpush1.msra.mxu0 %v391
          %397 = vmatprep.subr.mxu0 0.0
          %398 = vmatpush1.msra.mxu0 0.0
          %399 = vmatprep.subr.mxu0 0.0
          %400 = vmatpush1.msra.mxu0 0.0
          %401 = vmatprep.subr.mxu0 0.0
          %402 = vmatpush1.msra.mxu0 0.0
          %403 = vmatprep.subr.mxu0 0.0
          %404 = vmatpush1.msra.mxu0 0.0
          %405 = vmatprep.subr.mxu0 0.0
          %406 = vmatpush1.msra.mxu0 0.0
          %407 = vmatprep.subr.mxu0 0.0
          %408 = vmatpush1.msra.mxu0 0.0
          %409 = vmatprep.subr.mxu0 0.0
          %410 = vmatpush1.msra.mxu0 0.0
          %411 = vmatprep.subr.mxu0 0.0
          %412 = vmatpush1.msra.mxu0 0.0
          %413 = vmatprep.subr.mxu0 0.0
          %414 = vmatpush1.msra.mxu0 0.0
          %415 = vmatprep.subr.mxu0 0.0
          %416 = vmatpush1.msra.mxu0 0.0
          %417 = vmatprep.subr.mxu0 0.0
          %418 = vmatpush1.msra.mxu0 0.0
          %419 = vmatprep.subr.mxu0 0.0
          %420 = vmatpush1.msra.mxu0 0.0
          %421 = vmatprep.subr.mxu0 0.0
          %422 = vmatpush1.msra.mxu0 0.0
          %423 = vmatprep.subr.mxu0 0.0
          %424 = vmatpush1.msra.mxu0 0.0
          %425 = vmatprep.subr.mxu0 0.0
          %426 = vmatpush1.msra.mxu0 0.0
          %427 = vmatprep.subr.mxu0 0.0
          %428 = vmatpush1.msra.mxu0 0.0
          %429 = vmatprep.subr.mxu0 0.0
          %430 = vmatpush1.msra.mxu0 0.0
          %431 = vmatprep.subr.mxu0 0.0
          %432 = vmatpush1.msra.mxu0 0.0
          %433 = vmatprep.subr.mxu0 0.0
          %434 = vmatpush1.msra.mxu0 0.0
          %435 = vmatprep.subr.mxu0 0.0
          %436 = vmatpush1.msra.mxu0 0.0
          %437 = vmatprep.subr.mxu0 0.0
          %438 = vmatpush1.msra.mxu0 0.0
          %439 = vmatprep.subr.mxu0 0.0
          %440 = vmatpush1.msra.mxu0 0.0
          %441 = vmatprep.subr.mxu0 0.0
          %442 = vmatpush1.msra.mxu0 0.0
          %443 = vmatprep.subr.mxu0 0.0
          %444 = vmatpush1.msra.mxu0 0.0
          %445 = vmatprep.subr.mxu0 0.0
          %446 = vmatpush1.msra.mxu0 0.0
          %447 = vmatprep.subr.mxu0 0.0
          %448 = vmatpush1.msra.mxu0 0.0
          %449 = vmatprep.subr.mxu0 0.0
          %450 = vmatpush1.msra.mxu0 0.0
          %451 = vmatprep.subr.mxu0 0.0
          %452 = vmatpush1.msra.mxu0 0.0
          %453 = vmatprep.subr.mxu0 0.0
          %454 = vmatpush1.msra.mxu0 0.0
          %455 = vmatprep.subr.mxu0 0.0
          %456 = vmatpush1.msra.mxu0 0.0
          %457 = vmatprep.subr.mxu0 0.0
          %458 = vmatpush1.msra.mxu0 0.0
          %459 = vmatprep.mubr.f32.mxu0 0.0
          %460 = vmatmul.mubr.f32.gmra.mrb[0].mxu0 %v393
          %v461 = vpop.f32.mrb[0].mxu0
          %v462 = vadd.f32 0.0, %v461
          %v463 = vpop.f32.mrb[0].mxu0
          %464 = vdwg.mxu0
          %466 = vrot.lane.b32.xlu0 %v462, 32
          %v467 = vpop.permute.xlu0 %466
          %vm469 = vcmask 523520
          %470 = vst.msk [vmem:[%s250] sm:$0xff] %vm469, %v467
          %471 = vst.msk [vmem:[%s257] sm:$0xff] %vm377, %v390
        $region44: #{tpu_custom_call.1} parent=27 // pred_fallthru
          _
        %p472 = scmp.ge.s32.totalorder %s286, %s258
        // Predicated region
        $region45: #{tpu_custom_call.1} parent=27 // pred_check
          %p473 = pneg %p472
        $region46: #{tpu_custom_call.1} parent=27 // pred_check_branch
          %475 = sbr.rel (%p473) target = $region48
        $region47: #{tpu_custom_call.1} parent=27 // pred_region
          %vm476 = vcmask 523520
          %477 = vst.msk [vmem:[%s250] sm:$0xff] %vm476, 0.0
          %vm478 = vcmask 64512
          %479 = vst.msk [vmem:[%s257] sm:$0xff] %vm478, 0.0
        $region48: #{tpu_custom_call.1} parent=27 // pred_fallthru
          _
        %s480 = sand.u32 %s108, 1
        %s481 = scalar_lea.sflag [#allocation8], %s480
        %s482 = sand.u32 %s108, 1
        %s483 = smul.addr %s482, 8
        %s484 = scalar_lea.vmem [#allocation11], %s483
        %s485 = sand.u32 %s136, 1
        %s486 = scalar_lea.sflag [#allocation13], %s485
        %s487 = sand.u32 %s136, 1
        %s488 = smul.addr %s487, 8
        %s489 = scalar_lea.vmem [#allocation12], %s488
        // Predicated region
        $region49: #{tpu_custom_call.1} parent=27 // pred_check
          %p490 = pneg %p118
        $region50: #{tpu_custom_call.1} parent=27 // pred_check_branch
          %492 = sbr.rel (%p490) target = $region52
        $region51: #{tpu_custom_call.1} parent=27 // pred_region
          %s494 = ssub.s32 128, 128
          %495 = vsyncadd %s481, %s494
          %s496 = sadd.s32 %s37, %s36
          %s497 = smul.addr %s496, 128
          %s498 = scalar_lea.hbm %s3, %s497
          %s500 = sshll.u32 %s484, 4
          %s501 = int_to_ptr.vmem [resolvable:$true] %s500
          %503 = dma.vmem_to_hbm [thread:$0]  %s501, 128, %s498, %s481
        $region52: #{tpu_custom_call.1} parent=27 // pred_fallthru
          _
        // Predicated region
        $region53: #{tpu_custom_call.1} parent=27 // pred_check
          %p504 = pneg %p146
        $region54: #{tpu_custom_call.1} parent=27 // pred_check_branch
          %506 = sbr.rel (%p504) target = $region56
        $region55: #{tpu_custom_call.1} parent=27 // pred_region
          %s508 = ssub.s32 128, 128
          %509 = vsyncadd %s486, %s508
          %s510 = sadd.s32 %s37, %s36
          %s511 = smul.addr %s510, 128
          %s512 = scalar_lea.hbm %s4, %s511
          %s514 = sshll.u32 %s489, 4
          %s515 = int_to_ptr.vmem [resolvable:$true] %s514
          %517 = dma.vmem_to_hbm [thread:$0]  %s515, 128, %s512, %s486
        $region56: #{tpu_custom_call.1} parent=27 // pred_fallthru
          _
      $region28: #{tpu_custom_call.1} parent=5 // pred_fallthru
        _
      %p518 = scmp.le.s32.totalorder 2, %s27
      // Predicated region
      $region57: #{tpu_custom_call.1} parent=5 // pred_check
        %p519 = pneg %p518
      $region58: #{tpu_custom_call.1} parent=5 // pred_check_branch
        %521 = sbr.rel (%p519) target = $region60
      $region59: #{tpu_custom_call.1} parent=5 // pred_region
        %s522 = ssub.s32 %s27, 2
        // Predicated region
        $region61: #{tpu_custom_call.1} parent=59 // pred_check
          %p523 = pneg %p124
        $region62: #{tpu_custom_call.1} parent=59 // pred_check_branch
          %525 = sbr.rel (%p523) target = $region64
        $region63: #{tpu_custom_call.1} parent=59 // pred_region
          %s526 = sand.u32 %s109, 1
          %s527 = scalar_lea.sflag [#allocation8], %s526
          %s528 = sand.u32 %s109, 1
          %s529 = smul.addr %s528, 8
          %s530 = scalar_lea.vmem [#allocation11], %s529
          %531 = dma.done %s527, 128
        $region64: #{tpu_custom_call.1} parent=59 // pred_fallthru
          _
        // Predicated region
        $region65: #{tpu_custom_call.1} parent=59 // pred_check
          %p532 = pneg %p152
        $region66: #{tpu_custom_call.1} parent=59 // pred_check_branch
          %534 = sbr.rel (%p532) target = $region68
        $region67: #{tpu_custom_call.1} parent=59 // pred_region
          %s535 = sand.u32 %s137, 1
          %s536 = scalar_lea.sflag [#allocation13], %s535
          %s537 = sand.u32 %s137, 1
          %s538 = smul.addr %s537, 8
          %s539 = scalar_lea.vmem [#allocation12], %s538
          %540 = dma.done %s536, 128
        $region68: #{tpu_custom_call.1} parent=59 // pred_fallthru
          _
      $region60: #{tpu_custom_call.1} parent=5 // pred_fallthru
        _
    $region6: #{tpu_custom_call.1} parent=1 // loop_footer
      %s31 = sadd.s32 1, %s27
    $region7: #{tpu_custom_call.1} parent=1 // loop_footer_branch
      %26 = sbr.rel target = $region3
    $region8: #{tpu_custom_call.1} parent=1 // loop_exit
      _
    %541 = vsyncpa [#allocation7], 1
    %s542 = scalar_lea.sflag [#allocation7], 1
    %543 = vsyncpa %s542, 1
    %544 = vsyncpa [#allocation10], 1
    %s545 = scalar_lea.sflag [#allocation10], 1
    %546 = vsyncpa %s545, 1
    %547 = vsyncpa [#allocation8], 1
    %s548 = scalar_lea.sflag [#allocation8], 1
    %549 = vsyncpa %s548, 1
    %550 = vsyncpa [#allocation13], 1
    %s551 = scalar_lea.sflag [#allocation13], 1
    %552 = vsyncpa %s551, 1

</llo_original>
